<compile_context>
chip_gen: v6e
topology: v6e:2x2x1
jax: 0.10.0
libtpu: 0.0.40
codegen_flags: <defaults>
</compile_context>

<pallas_src>
import functools

import numpy as np
import jax
import jax.numpy as jnp
from jax.experimental import pallas as pl
from jax.experimental.pallas import tpu as pltpu

_LANE = 128
_SUBLANE = 8


def _round_up(a: int, b: int) -> int:
    return ((a + b - 1) // b) * b


def _build_fused_dft_mats(L: int, fpad: int):
    """Fused real-DFT matrices for rfft/irfft with norm='ortho'.

    Returns:
      wfwd: (L, 2*fpad)  so that  x @ wfwd = [X_R | X_I]  (zero-padded freqs)
      winv: (2*fpad, L)  so that  [Y_R | Y_I] @ winv = irfft(Y, n=L)
    """
    F = L // 2 + 1
    scale = 1.0 / np.sqrt(L)

    n = np.arange(L, dtype=np.float64)[:, None]           # (L, 1)
    k = np.arange(F, dtype=np.float64)[None, :]           # (1, F)
    ang = 2.0 * np.pi * n * k / L                         # (L, F)
    cosf = np.cos(ang) * scale                            # X_R = x @ cosf
    sinf = -np.sin(ang) * scale                           # X_I = x @ sinf

    # irfft (ortho): x[n] = (1/sqrt(L)) * sum_k c_k (Y_R[k] cos - Y_I[k] sin)
    c = np.full((F,), 2.0, dtype=np.float64)
    c[0] = 1.0
    if L % 2 == 0:
        c[-1] = 1.0
    kk = np.arange(F, dtype=np.float64)[:, None]          # (F, 1)
    nn = np.arange(L, dtype=np.float64)[None, :]          # (1, L)
    ang2 = 2.0 * np.pi * kk * nn / L                      # (F, L)
    icos = (c[:, None] * np.cos(ang2)) * scale            # multiplies Y_R
    isin = (-c[:, None] * np.sin(ang2)) * scale           # multiplies Y_I

    wfwd = np.zeros((L, 2 * fpad), dtype=np.float32)
    wfwd[:, :F] = cosf
    wfwd[:, fpad:fpad + F] = sinf

    winv = np.zeros((2 * fpad, L), dtype=np.float32)
    winv[:F, :] = icos
    winv[fpad:fpad + F, :] = isin

    return jnp.asarray(wfwd), jnp.asarray(winv)


def _lfft_kernel(x_ref, wr_ref, wi_ref, fwd_ref, inv_ref, o_ref, *, fpad: int):
    x = x_ref[...]                                                      # (TR, L)
    # One fused forward real-DFT matmul: columns [0:fpad) = real, [fpad:2fpad) = imag.
    xf = jnp.dot(x, fwd_ref[...], preferred_element_type=jnp.float32)   # (TR, 2*fpad)
    xr = xf[:, :fpad]
    xi = xf[:, fpad:]
    # Per-row (= per-channel) complex spectral multiply, in f32.
    wr = wr_ref[...]
    wi = wi_ref[...]
    yr = xr * wr - xi * wi
    yi = xr * wi + xi * wr
    y = jnp.concatenate([yr, yi], axis=-1)                              # (TR, 2*fpad)
    # One fused inverse real-DFT matmul.
    out = jnp.dot(y, inv_ref[...], preferred_element_type=jnp.float32)  # (TR, L)
    o_ref[...] = out.astype(o_ref.dtype)


def lfft_forward(x: jax.Array, parameter: jax.Array, *, max_row_tile: int = 256) -> jax.Array:
    """x: (B, C, L) float32; parameter: (C, L//2+1, 2) float32."""
    B, C, L = x.shape
    F = L // 2 + 1
    assert parameter.shape == (C, F, 2)

    fpad = _round_up(F, _LANE)               # lane-aligned frequency axis
    R = B * C                                # fold batch & channels into MXU M dim
    TR = min(max_row_tile, _round_up(R, _SUBLANE))
    Rpad = _round_up(R, TR)

    # Rows: (B*C, L), zero-padded to a multiple of the row tile.
    x2d = x.reshape(R, L)
    if Rpad != R:
        x2d = jnp.pad(x2d, ((0, Rpad - R), (0, 0)))

    # Spectral weights, padded on the frequency axis (zeros -> no leakage)
    # and tiled across batch so they share the row tiling of x.
    wr = parameter[:, :, 0]
    wi = parameter[:, :, 1]
    if fpad != F:
        wr = jnp.pad(wr, ((0, 0), (0, fpad - F)))
        wi = jnp.pad(wi, ((0, 0), (0, fpad - F)))
    wr_full = jnp.tile(wr, (B, 1))
    wi_full = jnp.tile(wi, (B, 1))
    if Rpad != R:
        wr_full = jnp.pad(wr_full, ((0, Rpad - R), (0, 0)))
        wi_full = jnp.pad(wi_full, ((0, Rpad - R), (0, 0)))

    wfwd, winv = _build_fused_dft_mats(L, fpad)

    grid = (Rpad // TR,)

    flops = 2 * Rpad * L * (2 * fpad) * 2 + 6 * Rpad * fpad
    bytes_accessed = 4 * (2 * Rpad * L + 2 * Rpad * fpad + 2 * (L * 2 * fpad))

    out2d = pl.pallas_call(
        functools.partial(_lfft_kernel, fpad=fpad),
        out_shape=jax.ShapeDtypeStruct((Rpad, L), jnp.float32),
        grid_spec=pltpu.PrefetchScalarGridSpec(
            num_scalar_prefetch=0,
            grid=grid,
            in_specs=[
                pl.BlockSpec((TR, L), lambda i: (i, 0)),          # x rows
                pl.BlockSpec((TR, fpad), lambda i: (i, 0)),       # W_R rows
                pl.BlockSpec((TR, fpad), lambda i: (i, 0)),       # W_I rows
                pl.BlockSpec((L, 2 * fpad), lambda i: (0, 0)),    # fused forward DFT
                pl.BlockSpec((2 * fpad, L), lambda i: (0, 0)),    # fused inverse DFT
            ],
            out_specs=pl.BlockSpec((TR, L), lambda i: (i, 0)),
        ),
        compiler_params=pltpu.CompilerParams(
            dimension_semantics=("parallel",),
            vmem_limit_bytes=64 * 1024 * 1024,
        ),
        cost_estimate=pl.CostEstimate(
            flops=int(flops),
            transcendentals=0,
            bytes_accessed=int(bytes_accessed),
        ),
    )(x2d, wr_full, wi_full, wfwd, winv)

    return out2d[:R].reshape(B, C, L)


if __name__ == "__main__":
    key = jax.random.PRNGKey(0)
    B, C, L = 2, 4, 16            # batch, in_planes, length
    F = L // 2 + 1

    kx, kp = jax.random.split(key)
    x = jax.random.normal(kx, (B, C, L), dtype=jnp.float32)
    # LFFT.parameter ~ randn(in_planes, L//2+1, 2)
    parameter = jax.random.normal(kp, (C, F, 2), dtype=jnp.float32)

    out = lfft_forward(x, parameter)
    out = jax.block_until_ready(out)

    # Reference (pure JAX, mirrors torch.fft.rfft / irfft with norm='ortho')
    fft_x = jnp.fft.rfft(x, axis=-1, norm="ortho")
    weight = parameter[:, :, 0] + 1j * parameter[:, :, 1]          # (C, F)
    ref = jnp.fft.irfft(fft_x * weight[None], n=L, axis=-1, norm="ortho")
    ref = jax.block_until_ready(ref)

    np.testing.assert_allclose(np.asarray(out), np.asarray(ref), rtol=1e-4, atol=1e-4)
    print("KERNEL_OK")
</pallas_src>

<mosaic_0001>
module attributes {stable_mosaic.version = 11 : i64} {
  func.func @_lfft_kernel(%arg0: i32, %arg1: memref<8x16xf32, #tpu.memory_space<vmem>>, %arg2: memref<8x128xf32, #tpu.memory_space<vmem>>, %arg3: memref<8x128xf32, #tpu.memory_space<vmem>>, %arg4: memref<16x256xf32, #tpu.memory_space<vmem>>, %arg5: memref<256x16xf32, #tpu.memory_space<vmem>>, %arg6: memref<8x16xf32, #tpu.memory_space<vmem>>) attributes {dimension_semantics = [#tpu.dimension_semantics<parallel>], iteration_bounds = array<i64: 1>, scalar_prefetch = 0 : i64, scratch_operands = 0 : i64, tpu.core_type = #tpu.core_type<tc>, window_params = [{transform_indices = @transform_0, window_bounds = array<i64: 8, 16>}, {transform_indices = @transform_1, window_bounds = array<i64: 8, 128>}, {transform_indices = @transform_2, window_bounds = array<i64: 8, 128>}, {pipeline_mode = #tpu.pipeline_mode<synchronous>, transform_indices = @transform_3, window_bounds = array<i64: 16, 256>}, {pipeline_mode = #tpu.pipeline_mode<synchronous>, transform_indices = @transform_4, window_bounds = array<i64: 256, 16>}, {transform_indices = @transform_5, window_bounds = array<i64: 8, 16>}]} {
    %c0 = arith.constant 0 : index
    %c0_0 = arith.constant 0 : index
    %0 = vector.load %arg1[%c0, %c0_0] : memref<8x16xf32, #tpu.memory_space<vmem>>, vector<8x16xf32>
    %c0_1 = arith.constant 0 : index
    %c0_2 = arith.constant 0 : index
    %1 = vector.load %arg4[%c0_1, %c0_2] : memref<16x256xf32, #tpu.memory_space<vmem>>, vector<16x256xf32>
    %cst = arith.constant dense<0.000000e+00> : vector<8x256xf32>
    %2 = tpu.matmul %0, %1, %cst {dimension_numbers = #tpu.dot_dimension_numbers<[1], [0], [0], [1], [0, 0, 1, 1], [], []>} : vector<8x16xf32>, vector<16x256xf32>, vector<8x256xf32> -> vector<8x256xf32>
    %3 = vector.extract_strided_slice %2 {offsets = [0, 0], sizes = [8, 128], strides = [1, 1]} : vector<8x256xf32> to vector<8x128xf32>
    %4 = vector.extract_strided_slice %2 {offsets = [0, 128], sizes = [8, 128], strides = [1, 1]} : vector<8x256xf32> to vector<8x128xf32>
    %c0_3 = arith.constant 0 : index
    %c0_4 = arith.constant 0 : index
    %5 = vector.load %arg2[%c0_3, %c0_4] : memref<8x128xf32, #tpu.memory_space<vmem>>, vector<8x128xf32>
    %c0_5 = arith.constant 0 : index
    %c0_6 = arith.constant 0 : index
    %6 = vector.load %arg3[%c0_5, %c0_6] : memref<8x128xf32, #tpu.memory_space<vmem>>, vector<8x128xf32>
    %7 = arith.mulf %3, %5 : vector<8x128xf32>
    %8 = arith.mulf %4, %6 : vector<8x128xf32>
    %9 = arith.subf %7, %8 : vector<8x128xf32>
    %10 = arith.mulf %3, %6 : vector<8x128xf32>
    %11 = arith.mulf %4, %5 : vector<8x128xf32>
    %12 = arith.addf %10, %11 : vector<8x128xf32>
    %13 = tpu.concatenate %9, %12 in 1 : vector<8x128xf32>, vector<8x128xf32> -> vector<8x256xf32>
    %c0_7 = arith.constant 0 : index
    %c0_8 = arith.constant 0 : index
    %14 = vector.load %arg5[%c0_7, %c0_8] : memref<256x16xf32, #tpu.memory_space<vmem>>, vector<256x16xf32>
    %cst_9 = arith.constant dense<0.000000e+00> : vector<8x16xf32>
    %15 = tpu.matmul %13, %14, %cst_9 {dimension_numbers = #tpu.dot_dimension_numbers<[1], [0], [0], [1], [0, 0, 1, 1], [], []>} : vector<8x256xf32>, vector<256x16xf32>, vector<8x16xf32> -> vector<8x16xf32>
    %c0_10 = arith.constant 0 : index
    %c0_11 = arith.constant 0 : index
    %16 = vector.load %arg6[%c0_10, %c0_11] : memref<8x16xf32, #tpu.memory_space<vmem>>, vector<8x16xf32>
    tpu.vector_store %arg6[%c0_10, %c0_11], %15 {strides = array<i32>} : memref<8x16xf32, #tpu.memory_space<vmem>>, vector<8x16xf32>,
    return
  }
  func.func @transform_0(%arg0: i32) -> (i32, i32) {
    %c0_i32 = arith.constant 0 : i32
    %c0_i32_0 = arith.constant 0 : i32
    return %arg0, %c0_i32 : i32, i32
  }
  func.func @transform_1(%arg0: i32) -> (i32, i32) {
    %c0_i32 = arith.constant 0 : i32
    %c0_i32_0 = arith.constant 0 : i32
    return %arg0, %c0_i32 : i32, i32
  }
  func.func @transform_2(%arg0: i32) -> (i32, i32) {
    %c0_i32 = arith.constant 0 : i32
    %c0_i32_0 = arith.constant 0 : i32
    return %arg0, %c0_i32 : i32, i32
  }
  func.func @transform_3(%arg0: i32) -> (i32, i32) {
    %c0_i32 = arith.constant 0 : i32
    %c0_i32_0 = arith.constant 0 : i32
    %c0_i32_1 = arith.constant 0 : i32
    return %c0_i32, %c0_i32_0 : i32, i32
  }
  func.func @transform_4(%arg0: i32) -> (i32, i32) {
    %c0_i32 = arith.constant 0 : i32
    %c0_i32_0 = arith.constant 0 : i32
    %c0_i32_1 = arith.constant 0 : i32
    return %c0_i32, %c0_i32_0 : i32, i32
  }
  func.func @transform_5(%arg0: i32) -> (i32, i32) {
    %c0_i32 = arith.constant 0 : i32
    %c0_i32_0 = arith.constant 0 : i32
    return %arg0, %c0_i32 : i32, i32
  }
}

</mosaic_0001>

<llo_original>
// kernel: tpu_custom_call.1
$region0: #{tpu_custom_call.1}
  #allocation0 [shape = 'u32[]', space=smem, size = 0x4, offset = 0x4, fixed_abs, tag = 'smem constant byte address 0x4 - core index']
  #allocation1 [shape = 'u32[144,128]{1,0:T(1,128)}', space=vmem, size = 0x12000, scoped, tag = 'internal scratch']
  %s0 = inlined_call_operand.vmem [shape: f32[8,16], index: 0, kind: input, shape index: {}]
  %s1 = inlined_call_operand.vmem [shape: f32[8,128], index: 1, kind: input, shape index: {}]
  %s2 = inlined_call_operand.vmem [shape: f32[8,128], index: 2, kind: input, shape index: {}]
  %s3 = inlined_call_operand.vmem [shape: f32[16,256], index: 3, kind: input, shape index: {}]
  %s4 = inlined_call_operand.vmem [shape: f32[256,16], index: 4, kind: input, shape index: {}]
  %s5 = inlined_call_operand.hbm [shape: f32[8,16], index: 5, kind: output, shape index: {}]
  %s6 = sld [smem:[#allocation0]]
  $region30: #{tpu_custom_call.1} parent=0
    _
  %s8 = ssub.s32 1, %s6
  %s9 = scalar_select 0, %s8, %s6
  $region1: #{tpu_custom_call.1} parent=0
    #allocation2 [shape = 'u8[4096]{0}', space=vmem, size = 0x1000, scoped, tag = 'output window, operand 0, single buffered']
    #allocation3 [shape = 's32[1]{0}', space=sflag, size = 0x4, scoped, tag = 'scoped memory for tpu_custom_call.1']
    %10 = vsyncpa [#allocation3], 0
    // Predicated region
    $region2: #{tpu_custom_call.1} parent=1 // pred_check
      _
    $region3: #{tpu_custom_call.1} parent=1 // pred_check_branch
      %12 = sbr.rel (0) target = $region5
    $region4: #{tpu_custom_call.1} parent=1 // pred_region
      _
    $region5: #{tpu_custom_call.1} parent=1 // pred_fallthru
      _
    // Predicated region
    $region6: #{tpu_custom_call.1} parent=1 // pred_check
      _
    $region7: #{tpu_custom_call.1} parent=1 // pred_check_branch
      %14 = sbr.rel (0) target = $region9
    $region8: #{tpu_custom_call.1} parent=1 // pred_region
      _
    $region9: #{tpu_custom_call.1} parent=1 // pred_fallthru
      _
    // Predicated region
    $region10: #{tpu_custom_call.1} parent=1 // pred_check
      _
    $region11: #{tpu_custom_call.1} parent=1 // pred_check_branch
      %16 = sbr.rel (0) target = $region13
    $region12: #{tpu_custom_call.1} parent=1 // pred_region
      _
    $region13: #{tpu_custom_call.1} parent=1 // pred_fallthru
      _
    // Predicated region
    $region14: #{tpu_custom_call.1} parent=1 // pred_check
      _
    $region15: #{tpu_custom_call.1} parent=1 // pred_check_branch
      %18 = sbr.rel (0) target = $region17
    $region16: #{tpu_custom_call.1} parent=1 // pred_region
      _
    $region17: #{tpu_custom_call.1} parent=1 // pred_fallthru
      _
    // Predicated region
    $region18: #{tpu_custom_call.1} parent=1 // pred_check
      _
    $region19: #{tpu_custom_call.1} parent=1 // pred_check_branch
      %20 = sbr.rel (0) target = $region21
    $region20: #{tpu_custom_call.1} parent=1 // pred_region
      _
    $region21: #{tpu_custom_call.1} parent=1 // pred_fallthru
      _
    %v21 = vld [vmem:[%s0] sm:$0xff]
    %v22 = vld [vmem:[%s3] sm:$0xff]
    %v23 = vld [vmem:[%s3 + $0x8] sm:$0xff]
    %v24 = vld [vmem:[%s3 + $0x10] sm:$0xff]
    %v25 = vld [vmem:[%s3 + $0x18] sm:$0xff]
    %vm26 = vcmask 130048
    %v28 = vsel %vm26, %v21, 0
    %30 = vmatprep.subr.mxu0 0.0
    %31 = vmatpush1.msra.mxu0 0.0
    %32 = vmatprep.subr.mxu0 0.0
    %33 = vmatpush1.msra.mxu0 0.0
    %34 = vmatprep.subr.mxu0 0.0
    %35 = vmatpush1.msra.mxu0 0.0
    %36 = vmatprep.subr.mxu0 0.0
    %37 = vmatpush1.msra.mxu0 0.0
    %38 = vmatprep.subr.mxu0 0.0
    %39 = vmatpush1.msra.mxu0 0.0
    %40 = vmatprep.subr.mxu0 0.0
    %41 = vmatpush1.msra.mxu0 0.0
    %42 = vmatprep.subr.mxu0 0.0
    %43 = vmatpush1.msra.mxu0 0.0
    %44 = vmatprep.subr.mxu0 0.0
    %45 = vmatpush1.msra.mxu0 0.0
    %46 = vmatprep.subr.mxu0 0.0
    %47 = vmatpush1.msra.mxu0 0.0
    %48 = vmatprep.subr.mxu0 0.0
    %49 = vmatpush1.msra.mxu0 0.0
    %50 = vmatprep.subr.mxu0 0.0
    %51 = vmatpush1.msra.mxu0 0.0
    %52 = vmatprep.subr.mxu0 0.0
    %53 = vmatpush1.msra.mxu0 0.0
    %54 = vmatprep.subr.mxu0 0.0
    %55 = vmatpush1.msra.mxu0 0.0
    %56 = vmatprep.subr.mxu0 0.0
    %57 = vmatpush1.msra.mxu0 0.0
    %58 = vmatprep.subr.mxu0 %v25
    %59 = vmatpush1.msra.mxu0 %v24
    %60 = vmatprep.subr.mxu0 %v23
    %61 = vmatpush1.msra.mxu0 %v22
    %62 = vmatprep.subr.mxu0 0.0
    %63 = vmatpush2.msra.mxu0 0.0
    %64 = vmatprep.subr.mxu0 0.0
    %65 = vmatpush2.msra.mxu0 0.0
    %66 = vmatprep.subr.mxu0 0.0
    %67 = vmatpush2.msra.mxu0 0.0
    %68 = vmatprep.subr.mxu0 0.0
    %69 = vmatpush2.msra.mxu0 0.0
    %70 = vmatprep.subr.mxu0 0.0
    %71 = vmatpush2.msra.mxu0 0.0
    %72 = vmatprep.subr.mxu0 0.0
    %73 = vmatpush2.msra.mxu0 0.0
    %74 = vmatprep.subr.mxu0 0.0
    %75 = vmatpush2.msra.mxu0 0.0
    %76 = vmatprep.subr.mxu0 0.0
    %77 = vmatpush2.msra.mxu0 0.0
    %78 = vmatprep.subr.mxu0 0.0
    %79 = vmatpush2.msra.mxu0 0.0
    %80 = vmatprep.subr.mxu0 0.0
    %81 = vmatpush2.msra.mxu0 0.0
    %82 = vmatprep.subr.mxu0 0.0
    %83 = vmatpush2.msra.mxu0 0.0
    %84 = vmatprep.subr.mxu0 0.0
    %85 = vmatpush2.msra.mxu0 0.0
    %86 = vmatprep.subr.mxu0 0.0
    %87 = vmatpush2.msra.mxu0 0.0
    %88 = vmatprep.subr.mxu0 0.0
    %89 = vmatpush2.msra.mxu0 0.0
    %90 = vmatprep.subr.mxu0 0.0
    %91 = vmatpush2.msra.mxu0 0.0
    %92 = vmatprep.subr.mxu0 0.0
    %93 = vmatpush2.msra.mxu0 0.0
    %94 = vmatprep.mubr.f32.mxu0 0.0
    %95 = vmatmul.mubr.f32.gmra.mxu0 %v28
    %v96 = vpop.f32.mrf.mxu0
    %v97 = vadd.f32 0.0, %v96
    %v98 = vpop.f32.mrf.mxu0
    %v99 = vadd.f32 0.0, %v98
    %100 = vdwg.mxu0
    %v101 = vld [vmem:[%s1] sm:$0xff]
    %v102 = vld [vmem:[%s2] sm:$0xff]
    %v103 = vmul.f32 %v97, %v101
    %v104 = vmul.f32 %v99, %v102
    %v105 = vsub.f32 %v103, %v104
    %v106 = vmul.f32 %v97, %v102
    %v107 = vmul.f32 %v99, %v101
    %v108 = vadd.f32 %v106, %v107
    %v109 = vld [vmem:[%s4] sm:$0xff]
    %v110 = vld [vmem:[%s4 + $0x8] sm:$0xff]
    %v111 = vld [vmem:[%s4 + $0x10] sm:$0xff]
    %v112 = vld [vmem:[%s4 + $0x18] sm:$0xff]
    %v113 = vld [vmem:[%s4 + $0x20] sm:$0xff]
    %v114 = vld [vmem:[%s4 + $0x28] sm:$0xff]
    %v115 = vld [vmem:[%s4 + $0x30] sm:$0xff]
    %v116 = vld [vmem:[%s4 + $0x38] sm:$0xff]
    %v117 = vld [vmem:[%s4 + $0x40] sm:$0xff]
    %v118 = vld [vmem:[%s4 + $0x48] sm:$0xff]
    %v119 = vld [vmem:[%s4 + $0x50] sm:$0xff]
    %v120 = vld [vmem:[%s4 + $0x58] sm:$0xff]
    %v121 = vld [vmem:[%s4 + $0x60] sm:$0xff]
    %v122 = vld [vmem:[%s4 + $0x68] sm:$0xff]
    %v123 = vld [vmem:[%s4 + $0x70] sm:$0xff]
    %v124 = vld [vmem:[%s4 + $0x78] sm:$0xff]
    %v125 = vld [vmem:[%s4 + $0x80] sm:$0xff]
    %v126 = vld [vmem:[%s4 + $0x88] sm:$0xff]
    %v127 = vld [vmem:[%s4 + $0x90] sm:$0xff]
    %v128 = vld [vmem:[%s4 + $0x98] sm:$0xff]
    %v129 = vld [vmem:[%s4 + $0xa0] sm:$0xff]
    %v130 = vld [vmem:[%s4 + $0xa8] sm:$0xff]
    %v131 = vld [vmem:[%s4 + $0xb0] sm:$0xff]
    %v132 = vld [vmem:[%s4 + $0xb8] sm:$0xff]
    %v133 = vld [vmem:[%s4 + $0xc0] sm:$0xff]
    %v134 = vld [vmem:[%s4 + $0xc8] sm:$0xff]
    %v135 = vld [vmem:[%s4 + $0xd0] sm:$0xff]
    %v136 = vld [vmem:[%s4 + $0xd8] sm:$0xff]
    %v137 = vld [vmem:[%s4 + $0xe0] sm:$0xff]
    %v138 = vld [vmem:[%s4 + $0xe8] sm:$0xff]
    %v139 = vld [vmem:[%s4 + $0xf0] sm:$0xff]
    %v140 = vld [vmem:[%s4 + $0xf8] sm:$0xff]
    %141 = vmatprep.subr.mxu0 0.0
    %142 = vmatpush1.msra.mxu0 %v124
    %143 = vmatprep.subr.mxu0 0.0
    %144 = vmatpush1.msra.mxu0 %v123
    %145 = vmatprep.subr.mxu0 0.0
    %146 = vmatpush1.msra.mxu0 %v122
    %147 = vmatprep.subr.mxu0 0.0
    %148 = vmatpush1.msra.mxu0 %v121
    %149 = vmatprep.subr.mxu0 0.0
    %150 = vmatpush1.msra.mxu0 %v120
    %151 = vmatprep.subr.mxu0 0.0
    %152 = vmatpush1.msra.mxu0 %v119
    %153 = vmatprep.subr.mxu0 0.0
    %154 = vmatpush1.msra.mxu0 %v118
    %155 = vmatprep.subr.mxu0 0.0
    %156 = vmatpush1.msra.mxu0 %v117
    %157 = vmatprep.subr.mxu0 0.0
    %158 = vmatpush1.msra.mxu0 %v116
    %159 = vmatprep.subr.mxu0 0.0
    %160 = vmatpush1.msra.mxu0 %v115
    %161 = vmatprep.subr.mxu0 0.0
    %162 = vmatpush1.msra.mxu0 %v114
    %163 = vmatprep.subr.mxu0 0.0
    %164 = vmatpush1.msra.mxu0 %v113
    %165 = vmatprep.subr.mxu0 0.0
    %166 = vmatpush1.msra.mxu0 %v112
    %167 = vmatprep.subr.mxu0 0.0
    %168 = vmatpush1.msra.mxu0 %v111
    %169 = vmatprep.subr.mxu0 0.0
    %170 = vmatpush1.msra.mxu0 %v110
    %171 = vmatprep.subr.mxu0 0.0
    %172 = vmatpush1.msra.mxu0 %v109
    %173 = vmatprep.subr.mxu0 0.0
    %174 = vmatpush2.msra.mxu0 %v140
    %175 = vmatprep.subr.mxu0 0.0
    %176 = vmatpush2.msra.mxu0 %v139
    %177 = vmatprep.subr.mxu0 0.0
    %178 = vmatpush2.msra.mxu0 %v138
    %179 = vmatprep.subr.mxu0 0.0
    %180 = vmatpush2.msra.mxu0 %v137
    %181 = vmatprep.subr.mxu0 0.0
    %182 = vmatpush2.msra.mxu0 %v136
    %183 = vmatprep.subr.mxu0 0.0
    %184 = vmatpush2.msra.mxu0 %v135
    %185 = vmatprep.subr.mxu0 0.0
    %186 = vmatpush2.msra.mxu0 %v134
    %187 = vmatprep.subr.mxu0 0.0
    %188 = vmatpush2.msra.mxu0 %v133
    %189 = vmatprep.subr.mxu0 0.0
    %190 = vmatpush2.msra.mxu0 %v132
    %191 = vmatprep.subr.mxu0 0.0
    %192 = vmatpush2.msra.mxu0 %v131
    %193 = vmatprep.subr.mxu0 0.0
    %194 = vmatpush2.msra.mxu0 %v130
    %195 = vmatprep.subr.mxu0 0.0
    %196 = vmatpush2.msra.mxu0 %v129
    %197 = vmatprep.subr.mxu0 0.0
    %198 = vmatpush2.msra.mxu0 %v128
    %199 = vmatprep.subr.mxu0 0.0
    %200 = vmatpush2.msra.mxu0 %v127
    %201 = vmatprep.subr.mxu0 0.0
    %202 = vmatpush2.msra.mxu0 %v126
    %203 = vmatprep.subr.mxu0 0.0
    %204 = vmatpush2.msra.mxu0 %v125
    %205 = vmatprep.mubr.f32.mxu0 %v108
    %206 = vmatmul.mubr.f32.gmra.mxu0 %v105
    %v207 = vpop.f32.mrf.mxu0
    %v208 = vadd.f32 0.0, %v207
    %v209 = vpop.f32.mrf.mxu0
    %210 = vdwg.mxu0
    %211 = vst.msk [vmem:[#allocation2] sm:$0xff] %vm26, %v208
    // Predicated region
    $region22: #{tpu_custom_call.1} parent=1 // pred_check
      _
    $region23: #{tpu_custom_call.1} parent=1 // pred_check_branch
      %213 = sbr.rel (0) target = $region25
    $region24: #{tpu_custom_call.1} parent=1 // pred_region
      %s215 = ssub.s32 128, 128
      %216 = vsyncadd [#allocation3], %s215
      %s218 = sshll.u32 [#allocation2], 4
      %s219 = int_to_ptr.vmem [resolvable:$true] %s218
      %221 = dma.vmem_to_hbm [thread:$0]  %s219, 128, %s5, [#allocation3]
    $region25: #{tpu_custom_call.1} parent=1 // pred_fallthru
      _
    // Predicated region
    $region26: #{tpu_custom_call.1} parent=1 // pred_check
      _
    $region27: #{tpu_custom_call.1} parent=1 // pred_check_branch
      %223 = sbr.rel (0) target = $region29
    $region28: #{tpu_custom_call.1} parent=1 // pred_region
      %224 = dma.done [#allocation3], 128
    $region29: #{tpu_custom_call.1} parent=1 // pred_fallthru
      _
    %225 = vsyncpa [#allocation3], 1

</llo_original>
